<compile_context>
chip_gen: v7x
topology: tpu7x:2x2x1
jax: 0.10.0
libtpu: 0.0.40
codegen_flags: <defaults>
</compile_context>

<pallas_src>
import functools
import math

import jax
import jax.numpy as jnp
from jax.experimental import pallas as pl
from jax.experimental.pallas import tpu as pltpu


def _res_attn_kernel(q_ref, k_ref, v_ref, a_ref, o_ref, *, scale):
    # q_ref: [1, tl, E], k_ref: [1, E, S], v_ref: [1, S, D]
    q = q_ref[0] * scale                       # fold scale into Q (tl*E muls)
    k = k_ref[0]
    v = v_ref[0]

    # scores[l, s] = sum_e q[l, e] * k[e, s]; native-dtype operands on the MXU,
    # f32 accumulation.
    scores = jnp.dot(q, k, preferred_element_type=jnp.float32)      # [tl, S] f32

    # Numerically-stable softmax over S (f32), matches torch.softmax.
    m = jnp.max(scores, axis=-1, keepdims=True)
    e = jnp.exp(scores - m)
    denom = jnp.sum(e, axis=-1, keepdims=True)
    inv = pl.reciprocal(denom, approx=False)   # [tl, 1] exact (holds 1e-4 tol)
    a = e * inv                                # broadcast multiply, no [tl,S] divide

    # TODO(synk): training-mode dropout on A (pltpu.prng_seed +
    # pltpu.stateful_bernoulli); eval-mode dropout is the identity.
    a_ref[0] = a.astype(a_ref.dtype)

    # A @ V in the value dtype (bf16 on bf16 models; f32 kept for f32 inputs to
    # preserve the reference tolerance), f32 accumulation.
    o = jnp.dot(a.astype(v.dtype), v, preferred_element_type=jnp.float32)
    o_ref[0] = o.astype(o_ref.dtype)           # [tl, D]


def _pick_l_tile(L):
    """Return (l_tile, padded_L)."""
    for cand in (256, 128):
        if L % cand == 0:
            return cand, L
    if L <= 512:
        return L, L                 # full-extent block: legal and VMEM-safe
    tl = 256                        # pad large, awkward L up to a 256 multiple
    return tl, -(-L // tl) * tl


def res_attention(queries, keys, values, scale=None, *, l_tile=None, attn_dtype=None):
    """queries [B,L,H,E], keys [B,S,H,E], values [B,S,H,D] -> (V [B,L,H,D], A [B,H,L,S])."""
    B, L, H, E = queries.shape
    _, S, _, D = values.shape
    scale = float(scale) if scale is not None else 1.0 / math.sqrt(E)
    attn_dtype = attn_dtype if attn_dtype is not None else queries.dtype

    # Lane-dense re-layouts:
    #   Q: [BH, L, E]   K: [BH, E, S] (lane dim = S)   V: [BH, S, D]
    q = jnp.transpose(queries, (0, 2, 1, 3)).reshape(B * H, L, E)
    k = jnp.transpose(keys, (0, 2, 3, 1)).reshape(B * H, E, S)
    v = jnp.transpose(values, (0, 2, 1, 3)).reshape(B * H, S, D)

    if l_tile is None:
        tl, l_pad = _pick_l_tile(L)
    else:
        tl = int(l_tile)
        l_pad = -(-L // tl) * tl
    if l_pad > L:
        # Padded query rows produce garbage A/V rows that are sliced off below;
        # softmax and A@V are row-wise, so valid rows are unaffected.
        q = jnp.pad(q, ((0, 0), (0, l_pad - L), (0, 0)))

    grid = (B * H, l_pad // tl)

    # TODO(synk): optionally pad S/D up to multiples of 128 (with -inf score
    # masking for padded keys) for lane-dense stores on non-production shapes.

    itemsize = jnp.dtype(queries.dtype).itemsize
    a_itemsize = jnp.dtype(attn_dtype).itemsize
    cost = pl.CostEstimate(
        flops=2 * B * H * l_pad * S * (E + D),
        transcendentals=B * H * l_pad * S,                  # exp in softmax
        bytes_accessed=(q.size + k.size + v.size) * itemsize   # K/V once per bh
        + B * H * l_pad * S * a_itemsize                    # A out (native dtype)
        + B * H * l_pad * D * itemsize,                     # V out
    )

    kernel = functools.partial(_res_attn_kernel, scale=scale)

    a_bh, o_bh = pl.pallas_call(
        kernel,
        out_shape=(
            jax.ShapeDtypeStruct((B * H, l_pad, S), attn_dtype),       # A
            jax.ShapeDtypeStruct((B * H, l_pad, D), queries.dtype),    # V
        ),
        grid_spec=pltpu.PrefetchScalarGridSpec(
            num_scalar_prefetch=0,
            grid=grid,
            in_specs=[
                pl.BlockSpec((1, tl, E), lambda b, i: (b, i, 0)),      # Q tile
                pl.BlockSpec((1, E, S), lambda b, i: (b, 0, 0)),       # K (resident per bh)
                pl.BlockSpec((1, S, D), lambda b, i: (b, 0, 0)),       # V (resident per bh)
            ],
            out_specs=[
                pl.BlockSpec((1, tl, S), lambda b, i: (b, i, 0)),      # A tile
                pl.BlockSpec((1, tl, D), lambda b, i: (b, i, 0)),      # V tile
            ],
        ),
        compiler_params=pltpu.CompilerParams(
            # Shard megacore on batch-heads only; keep K/V residency per core.
            dimension_semantics=("parallel", "arbitrary"),
            vmem_limit_bytes=48 * 1024 * 1024,
        ),
        cost_estimate=cost,
    )(q, k, v)

    if l_pad > L:
        a_bh = a_bh[:, :L, :]
        o_bh = o_bh[:, :L, :]

    A = a_bh.reshape(B, H, L, S)                                 # [B, H, L, S]
    V = jnp.transpose(o_bh.reshape(B, H, L, D), (0, 2, 1, 3))    # [B, L, H, D]
    return V, A


class ResAttention:
    """JAX/Pallas port of the PyTorch ResAttention module (eval mode)."""

    def __init__(self, attention_dropout=0.1, scale=None):
        self.scale = scale
        # TODO(synk): attention_dropout only matters in training mode; the
        # Pallas kernel implements eval-mode (identity) dropout.
        self.dropout_rate = attention_dropout

    def __call__(self, queries, keys, values, res=False, attn=None):
        # `res` / `attn` are unused by the original forward as well.
        return res_attention(queries, keys, values, scale=self.scale)


if __name__ == "__main__":
    # Small shapes consistent with the module: B, L=S, H, E=D.
    B, L, S, H, E, D = 2, 16, 16, 4, 8, 8

    key = jax.random.PRNGKey(0)
    kq, kk, kv = jax.random.split(key, 3)
    queries = jax.random.normal(kq, (B, L, H, E), dtype=jnp.float32)
    keys = jax.random.normal(kk, (B, S, H, E), dtype=jnp.float32)
    values = jax.random.normal(kv, (B, S, H, D), dtype=jnp.float32)

    mod = ResAttention(attention_dropout=0.1, scale=None)
    V, A = mod(queries, keys, values)
    V = jax.block_until_ready(V)
    A = jax.block_until_ready(A)

    # Plain-JAX reference (same math as the PyTorch forward, eval mode).
    scale = 1.0 / math.sqrt(E)
    scores_ref = jnp.einsum("blhe,bshe->bhls", queries, keys)
    A_ref = jax.nn.softmax(scale * scores_ref, axis=-1)
    V_ref = jnp.einsum("bhls,bshd->blhd", A_ref, values)

    assert V.shape == (B, L, H, D), V.shape
    assert A.shape == (B, H, L, S), A.shape
    assert A.dtype == queries.dtype, A.dtype
    assert jnp.allclose(A, A_ref, atol=1e-4, rtol=1e-4)
    assert jnp.allclose(V, V_ref, atol=1e-4, rtol=1e-4)
    print("KERNEL_OK")
</pallas_src>

<mosaic_0001>
module attributes {stable_mosaic.version = 11 : i64} {
  func.func @_res_attn_kernel(%arg0: i32, %arg1: i32, %arg2: memref<1x16x8xf32, #tpu.memory_space<vmem>>, %arg3: memref<1x8x16xf32, #tpu.memory_space<vmem>>, %arg4: memref<1x16x8xf32, #tpu.memory_space<vmem>>, %arg5: memref<1x16x16xf32, #tpu.memory_space<vmem>>, %arg6: memref<1x16x8xf32, #tpu.memory_space<vmem>>) attributes {dimension_semantics = [#tpu.dimension_semantics<parallel>, #tpu.dimension_semantics<arbitrary>], iteration_bounds = array<i64: 8, 1>, scalar_prefetch = 0 : i64, scratch_operands = 0 : i64, tpu.core_type = #tpu.core_type<tc>, window_params = [{transform_indices = @transform_0, window_bounds = array<i64: 1, 16, 8>}, {transform_indices = @transform_1, window_bounds = array<i64: 1, 8, 16>}, {transform_indices = @transform_2, window_bounds = array<i64: 1, 16, 8>}, {transform_indices = @transform_3, window_bounds = array<i64: 1, 16, 16>}, {transform_indices = @transform_4, window_bounds = array<i64: 1, 16, 8>}]} {
    %c0 = arith.constant 0 : index
    %c0_0 = arith.constant 0 : index
    %c0_1 = arith.constant 0 : index
    %0 = vector.load %arg2[%c0, %c0_0, %c0_1] : memref<1x16x8xf32, #tpu.memory_space<vmem>>, vector<1x16x8xf32>
    %1 = vector.shape_cast %0 : vector<1x16x8xf32> to vector<16x8xf32>
    %cst = arith.constant 0.353553385 : f32
    %2 = vector.broadcast %cst : f32 to vector<16x8xf32>
    %3 = arith.mulf %1, %2 : vector<16x8xf32>
    %c0_2 = arith.constant 0 : index
    %c0_3 = arith.constant 0 : index
    %c0_4 = arith.constant 0 : index
    %4 = vector.load %arg3[%c0_2, %c0_3, %c0_4] : memref<1x8x16xf32, #tpu.memory_space<vmem>>, vector<1x8x16xf32>
    %5 = vector.shape_cast %4 : vector<1x8x16xf32> to vector<8x16xf32>
    %c0_5 = arith.constant 0 : index
    %c0_6 = arith.constant 0 : index
    %c0_7 = arith.constant 0 : index
    %6 = vector.load %arg4[%c0_5, %c0_6, %c0_7] : memref<1x16x8xf32, #tpu.memory_space<vmem>>, vector<1x16x8xf32>
    %7 = vector.shape_cast %6 : vector<1x16x8xf32> to vector<16x8xf32>
    %cst_8 = arith.constant dense<0.000000e+00> : vector<16x16xf32>
    %8 = tpu.matmul %3, %5, %cst_8 {dimension_numbers = #tpu.dot_dimension_numbers<[1], [0], [0], [1], [0, 0, 1, 1], [], []>} : vector<16x8xf32>, vector<8x16xf32>, vector<16x16xf32> -> vector<16x16xf32>
    %cst_9 = arith.constant dense<0xFF800000> : vector<16xf32>
    %9 = vector.multi_reduction <maximumf>, %8, %cst_9 [1] : vector<16x16xf32> to vector<16xf32>
    %10 = vector.shape_cast %9 : vector<16xf32> to vector<16x1xf32>
    %11 = vector.broadcast %10 : vector<16x1xf32> to vector<16x16xf32>
    %12 = arith.subf %8, %11 : vector<16x16xf32>
    %13 = math.exp %12 : vector<16x16xf32>
    %cst_10 = arith.constant dense<0.000000e+00> : vector<16xf32>
    %14 = vector.multi_reduction <add>, %13, %cst_10 [1] : vector<16x16xf32> to vector<16xf32>
    %15 = vector.shape_cast %14 : vector<16xf32> to vector<16x1xf32>
    %16 = tpu.reciprocal %15 : vector<16x1xf32> -> vector<16x1xf32>
    %17 = vector.broadcast %16 : vector<16x1xf32> to vector<16x16xf32>
    %18 = arith.mulf %13, %17 : vector<16x16xf32>
    %c0_11 = arith.constant 0 : index
    %c0_12 = arith.constant 0 : index
    %c0_13 = arith.constant 0 : index
    %19 = vector.load %arg5[%c0_11, %c0_12, %c0_13] : memref<1x16x16xf32, #tpu.memory_space<vmem>>, vector<1x16x16xf32>
    %20 = vector.shape_cast %19 : vector<1x16x16xf32> to vector<16x16xf32>
    %21 = vector.shape_cast %18 : vector<16x16xf32> to vector<1x16x16xf32>
    tpu.vector_store %arg5[%c0_11, %c0_12, %c0_13], %21 {strides = array<i32>} : memref<1x16x16xf32, #tpu.memory_space<vmem>>, vector<1x16x16xf32>,
    %cst_14 = arith.constant dense<0.000000e+00> : vector<16x8xf32>
    %22 = tpu.matmul %18, %7, %cst_14 {dimension_numbers = #tpu.dot_dimension_numbers<[1], [0], [0], [1], [0, 0, 1, 1], [], []>} : vector<16x16xf32>, vector<16x8xf32>, vector<16x8xf32> -> vector<16x8xf32>
    %c0_15 = arith.constant 0 : index
    %c0_16 = arith.constant 0 : index
    %c0_17 = arith.constant 0 : index
    %23 = vector.load %arg6[%c0_15, %c0_16, %c0_17] : memref<1x16x8xf32, #tpu.memory_space<vmem>>, vector<1x16x8xf32>
    %24 = vector.shape_cast %23 : vector<1x16x8xf32> to vector<16x8xf32>
    %25 = vector.shape_cast %22 : vector<16x8xf32> to vector<1x16x8xf32>
    tpu.vector_store %arg6[%c0_15, %c0_16, %c0_17], %25 {strides = array<i32>} : memref<1x16x8xf32, #tpu.memory_space<vmem>>, vector<1x16x8xf32>,
    return
  }
  func.func @transform_0(%arg0: i32, %arg1: i32) -> (i32, i32, i32) {
    %c0_i32 = arith.constant 0 : i32
    %c0_i32_0 = arith.constant 0 : i32
    return %arg0, %arg1, %c0_i32 : i32, i32, i32
  }
  func.func @transform_1(%arg0: i32, %arg1: i32) -> (i32, i32, i32) {
    %c0_i32 = arith.constant 0 : i32
    %c0_i32_0 = arith.constant 0 : i32
    %c0_i32_1 = arith.constant 0 : i32
    return %arg0, %c0_i32, %c0_i32_0 : i32, i32, i32
  }
  func.func @transform_2(%arg0: i32, %arg1: i32) -> (i32, i32, i32) {
    %c0_i32 = arith.constant 0 : i32
    %c0_i32_0 = arith.constant 0 : i32
    %c0_i32_1 = arith.constant 0 : i32
    return %arg0, %c0_i32, %c0_i32_0 : i32, i32, i32
  }
  func.func @transform_3(%arg0: i32, %arg1: i32) -> (i32, i32, i32) {
    %c0_i32 = arith.constant 0 : i32
    %c0_i32_0 = arith.constant 0 : i32
    return %arg0, %arg1, %c0_i32 : i32, i32, i32
  }
  func.func @transform_4(%arg0: i32, %arg1: i32) -> (i32, i32, i32) {
    %c0_i32 = arith.constant 0 : i32
    %c0_i32_0 = arith.constant 0 : i32
    return %arg0, %arg1, %c0_i32 : i32, i32, i32
  }
}

</mosaic_0001>

<llo_original>
// kernel: tpu_custom_call.1
$region0: #{tpu_custom_call.1}
  #allocation0 [shape = 'u32[]', space=smem, size = 0x4, offset = 0x4, fixed_abs, tag = 'smem constant byte address 0x4 - core index']
  #allocation1 [shape = 'u32[144,128]{1,0:T(1,128)}', space=vmem, size = 0x12000, scoped, tag = 'internal scratch']
  %s0 = inlined_call_operand.vmem [shape: f32[8,16,8], index: 0, kind: input, shape index: {}]
  %s1 = inlined_call_operand.vmem [shape: f32[8,8,16], index: 1, kind: input, shape index: {}]
  %s2 = inlined_call_operand.vmem [shape: f32[8,16,8], index: 2, kind: input, shape index: {}]
  %s3 = inlined_call_operand.hbm [shape: f32[8,16,16], index: 3, kind: output, shape index: {0}]
  %s4 = inlined_call_operand.vmem [shape: f32[8,16,8], index: 4, kind: output, shape index: {1}]
  %5 = xla_tuple %s3, %s4
  %s6 = sld [smem:[#allocation0]]
  $region53: #{tpu_custom_call.1} parent=0
    _
  %s8 = ssub.s32 1, %s6
  %s9 = scalar_select 0, %s8, %s6
  $region1: #{tpu_custom_call.1} parent=0
    #allocation2 [shape = 'u8[16384]{0}', space=vmem, size = 0x4000, scoped, tag = 'output window, operand 0']
    #allocation3 [shape = 's32[2]{0}', space=sflag, size = 0x8, scoped, tag = 'scoped memory for tpu_custom_call.1']
    %10 = vsyncpa [#allocation3], 0
    %s11 = scalar_lea.sflag [#allocation3], 1
    %12 = vsyncpa %s11, 0
    loop: start=0, step=1, limit=10
    $region2: #{tpu_custom_call.1} parent=1 // loop_pre_header
      _
    $region3: #{tpu_custom_call.1} parent=1 // loop_header
      %s14 = sphi 0, %s18
      %p15 = scmp.ge.s32.totalorder %s14, 10
      %s21 = sphi 0, %s33
      %s22 = sphi 0, %s29
      %s23 = sphi 0, %s21
      %s24 = sphi 0, %s22
      %s25 = sphi 0, %s23
      %s26 = sphi 0, %s24
      %s38 = sphi 0, %s40
      %s41 = sphi 0, %s38
      %s42 = sphi 0, %s41
      %s58 = sphi 0, %s42
      %s64 = sphi 0, %s66
      %s67 = sphi 0, %s64
      %s68 = sphi 0, %s67
      %s84 = sphi 0, %s68
      %s90 = sphi 0, %s92
      %s93 = sphi 0, %s90
      %s94 = sphi 0, %s93
      %s110 = sphi 0, %s94
      %s118 = sphi 0, %s120
      %s121 = sphi 0, %s118
      %s122 = sphi 0, %s121
      %s138 = sphi 0, %s122
      %s146 = sphi 0, %s148
      %s149 = sphi 0, %s146
      %s150 = sphi 0, %s149
      %s166 = sphi 0, %s150
    $region4: #{tpu_custom_call.1} parent=1 // loop_header_branch
      %17 = sbr.rel (%p15) target = $region8
    $region5: #{tpu_custom_call.1} parent=1 // loop_body
      %s19 = ssub.s32 %s14, 1
      %s20 = ssub.s32 %s14, 2
      %s27 = sadd.s32 1, %s22
      %p28 = scmp.ge.s32.totalorder %s27, 1
      %s29 = scalar_select %p28, 0, %s27
      %s30 = sadd.s32 1, %s21
      %s31 = scalar_select %p28, %s30, %s21
      %p32 = scmp.ge.s32.totalorder %s31, 8
      %s33 = scalar_select %p32, 0, %s31
      %s34 = ssub.s32 %s21, %s33
      %s35 = ssub.s32 %s22, %s29
      %s36 = sor.u32 %s34, %s35
      %p37 = scmp.eq.s32.totalorder %s36, 0
      %s39 = sadd.s32 %s38, 1
      %s40 = scalar_select %p37, %s38, %s39
      %p43 = pneg %p37
      %p44 = scmp.eq.s32.totalorder %s14, 7
      %p45 = por %p43, %p44
      %p46 = scmp.ne.s32.totalorder %s38, %s41
      %p47 = scmp.eq.s32.totalorder %s14, 0
      %p48 = por %p46, %p47
      %p49 = scmp.ne.s32.totalorder %s38, %s41
      %p50 = scmp.eq.s32.totalorder %s19, 7
      %p51 = por %p49, %p50
      %p52 = scmp.ne.s32.totalorder %s41, %s42
      %p53 = scmp.eq.s32.totalorder %s19, 0
      %p54 = por %p52, %p53
      %p55 = scmp.ne.s32.totalorder %s41, %s42
      %p56 = scmp.eq.s32.totalorder %s20, 7
      %p57 = por %p55, %p56
      %p59 = scmp.ne.s32.totalorder %s42, %s58
      %p60 = scmp.eq.s32.totalorder %s20, 0
      %p61 = por %p59, %p60
      %s62 = ssub.s32 %s21, %s33
      %p63 = scmp.eq.s32.totalorder %s62, 0
      %s65 = sadd.s32 %s64, 1
      %s66 = scalar_select %p63, %s64, %s65
      %p69 = pneg %p63
      %p70 = scmp.eq.s32.totalorder %s14, 7
      %p71 = por %p69, %p70
      %p72 = scmp.ne.s32.totalorder %s64, %s67
      %p73 = scmp.eq.s32.totalorder %s14, 0
      %p74 = por %p72, %p73
      %p75 = scmp.ne.s32.totalorder %s64, %s67
      %p76 = scmp.eq.s32.totalorder %s19, 7
      %p77 = por %p75, %p76
      %p78 = scmp.ne.s32.totalorder %s67, %s68
      %p79 = scmp.eq.s32.totalorder %s19, 0
      %p80 = por %p78, %p79
      %p81 = scmp.ne.s32.totalorder %s67, %s68
      %p82 = scmp.eq.s32.totalorder %s20, 7
      %p83 = por %p81, %p82
      %p85 = scmp.ne.s32.totalorder %s68, %s84
      %p86 = scmp.eq.s32.totalorder %s20, 0
      %p87 = por %p85, %p86
      %s88 = ssub.s32 %s21, %s33
      %p89 = scmp.eq.s32.totalorder %s88, 0
      %s91 = sadd.s32 %s90, 1
      %s92 = scalar_select %p89, %s90, %s91
      %p95 = pneg %p89
      %p96 = scmp.eq.s32.totalorder %s14, 7
      %p97 = por %p95, %p96
      %p98 = scmp.ne.s32.totalorder %s90, %s93
      %p99 = scmp.eq.s32.totalorder %s14, 0
      %p100 = por %p98, %p99
      %p101 = scmp.ne.s32.totalorder %s90, %s93
      %p102 = scmp.eq.s32.totalorder %s19, 7
      %p103 = por %p101, %p102
      %p104 = scmp.ne.s32.totalorder %s93, %s94
      %p105 = scmp.eq.s32.totalorder %s19, 0
      %p106 = por %p104, %p105
      %p107 = scmp.ne.s32.totalorder %s93, %s94
      %p108 = scmp.eq.s32.totalorder %s20, 7
      %p109 = por %p107, %p108
      %p111 = scmp.ne.s32.totalorder %s94, %s110
      %p112 = scmp.eq.s32.totalorder %s20, 0
      %p113 = por %p111, %p112
      %s114 = ssub.s32 %s21, %s33
      %s115 = ssub.s32 %s22, %s29
      %s116 = sor.u32 %s114, %s115
      %p117 = scmp.eq.s32.totalorder %s116, 0
      %s119 = sadd.s32 %s118, 1
      %s120 = scalar_select %p117, %s118, %s119
      %p123 = pneg %p117
      %p124 = scmp.eq.s32.totalorder %s14, 7
      %p125 = por %p123, %p124
      %p126 = scmp.ne.s32.totalorder %s118, %s121
      %p127 = scmp.eq.s32.totalorder %s14, 0
      %p128 = por %p126, %p127
      %p129 = scmp.ne.s32.totalorder %s118, %s121
      %p130 = scmp.eq.s32.totalorder %s19, 7
      %p131 = por %p129, %p130
      %p132 = scmp.ne.s32.totalorder %s121, %s122
      %p133 = scmp.eq.s32.totalorder %s19, 0
      %p134 = por %p132, %p133
      %p135 = scmp.ne.s32.totalorder %s121, %s122
      %p136 = scmp.eq.s32.totalorder %s20, 7
      %p137 = por %p135, %p136
      %p139 = scmp.ne.s32.totalorder %s122, %s138
      %p140 = scmp.eq.s32.totalorder %s20, 0
      %p141 = por %p139, %p140
      %s142 = ssub.s32 %s21, %s33
      %s143 = ssub.s32 %s22, %s29
      %s144 = sor.u32 %s142, %s143
      %p145 = scmp.eq.s32.totalorder %s144, 0
      %s147 = sadd.s32 %s146, 1
      %s148 = scalar_select %p145, %s146, %s147
      %p151 = pneg %p145
      %p152 = scmp.eq.s32.totalorder %s14, 7
      %p153 = por %p151, %p152
      %p154 = scmp.ne.s32.totalorder %s146, %s149
      %p155 = scmp.eq.s32.totalorder %s14, 0
      %p156 = por %p154, %p155
      %p157 = scmp.ne.s32.totalorder %s146, %s149
      %p158 = scmp.eq.s32.totalorder %s19, 7
      %p159 = por %p157, %p158
      %p160 = scmp.ne.s32.totalorder %s149, %s150
      %p161 = scmp.eq.s32.totalorder %s19, 0
      %p162 = por %p160, %p161
      %p163 = scmp.ne.s32.totalorder %s149, %s150
      %p164 = scmp.eq.s32.totalorder %s20, 7
      %p165 = por %p163, %p164
      %p167 = scmp.ne.s32.totalorder %s150, %s166
      %p168 = scmp.eq.s32.totalorder %s20, 0
      %p169 = por %p167, %p168
      %p170 = scmp.le.s32.totalorder 1, %s14
      %p171 = scmp.lt.s32.totalorder %s14, 9
      %p172 = pnand %p170, %p171
      %p173 = pneg %p172
      // Predicated region
      $region9: #{tpu_custom_call.1} parent=5 // pred_check
        _
      $region10: #{tpu_custom_call.1} parent=5 // pred_check_branch
        %175 = sbr.rel (%p172) target = $region12
      $region11: #{tpu_custom_call.1} parent=5 // pred_region
        %s176 = ssub.s32 %s14, 1
      $region12: #{tpu_custom_call.1} parent=5 // pred_fallthru
        _
      %p177 = scmp.lt.s32.totalorder %s14, 8
      // Predicated region
      $region13: #{tpu_custom_call.1} parent=5 // pred_check
        %p178 = pneg %p177
      $region14: #{tpu_custom_call.1} parent=5 // pred_check_branch
        %180 = sbr.rel (%p178) target = $region16
      $region15: #{tpu_custom_call.1} parent=5 // pred_region
        // Predicated region
        $region17: #{tpu_custom_call.1} parent=15 // pred_check
          %p181 = pneg %p48
        $region18: #{tpu_custom_call.1} parent=15 // pred_check_branch
          %183 = sbr.rel (%p181) target = $region20
        $region19: #{tpu_custom_call.1} parent=15 // pred_region
          %s184 = smul.u32 2, %s22
          %p185 = scmp.lt.s32.totalorder %s21, 7
          %s186 = scalar_select %p185, %s21, 7
          %p187 = scmp.lt.s32.totalorder %s184, 1
          %s188 = scalar_select %p187, %s184, 1
          %s189 = smul.addr %s186, 2
          %s190 = sadd.s32 %s188, %s189
          %s191 = smul.addr %s190, 8
          %s192 = scalar_lea.vmem %s0, %s191
          %s193 = smul.u32 2, %s22
        $region20: #{tpu_custom_call.1} parent=15 // pred_fallthru
          _
        // Predicated region
        $region21: #{tpu_custom_call.1} parent=15 // pred_check
          %p194 = pneg %p74
        $region22: #{tpu_custom_call.1} parent=15 // pred_check_branch
          %196 = sbr.rel (%p194) target = $region24
        $region23: #{tpu_custom_call.1} parent=15 // pred_region
          %p197 = scmp.lt.s32.totalorder %s21, 7
          %s198 = scalar_select %p197, %s21, 7
          %s199 = smul.addr %s198, 8
          %s200 = scalar_lea.vmem %s1, %s199
        $region24: #{tpu_custom_call.1} parent=15 // pred_fallthru
          _
        // Predicated region
        $region25: #{tpu_custom_call.1} parent=15 // pred_check
          %p201 = pneg %p100
        $region26: #{tpu_custom_call.1} parent=15 // pred_check_branch
          %203 = sbr.rel (%p201) target = $region28
        $region27: #{tpu_custom_call.1} parent=15 // pred_region
          %p204 = scmp.lt.s32.totalorder %s21, 7
          %s205 = scalar_select %p204, %s21, 7
          %s206 = smul.addr %s205, 2
          %s207 = smul.addr %s206, 8
          %s208 = scalar_lea.vmem %s2, %s207
        $region28: #{tpu_custom_call.1} parent=15 // pred_fallthru
          _
      $region16: #{tpu_custom_call.1} parent=5 // pred_fallthru
        _
      %p209 = scmp.le.s32.totalorder 1, %s14
      %p210 = scmp.lt.s32.totalorder %s14, 9
      %p211 = pnand %p209, %p210
      %p212 = pneg %p211
      // Predicated region
      $region29: #{tpu_custom_call.1} parent=5 // pred_check
        _
      $region30: #{tpu_custom_call.1} parent=5 // pred_check_branch
        %214 = sbr.rel (%p211) target = $region32
      $region31: #{tpu_custom_call.1} parent=5 // pred_region
        %s215 = ssub.s32 %s14, 1
        %s216 = smul.u32 2, %s24
        %p217 = scmp.lt.s32.totalorder %s23, 7
        %s218 = scalar_select %p217, %s23, 7
        %p219 = scmp.lt.s32.totalorder %s216, 1
        %s220 = scalar_select %p219, %s216, 1
        %s221 = smul.addr %s218, 2
        %s222 = sadd.s32 %s220, %s221
        %s223 = smul.addr %s222, 8
        %s224 = scalar_lea.vmem %s0, %s223
        %p225 = pneg %p54
        %p226 = pneg %p51
        %p227 = scmp.lt.s32.totalorder %s23, 7
        %s228 = scalar_select %p227, %s23, 7
        %s229 = smul.addr %s228, 8
        %s230 = scalar_lea.vmem %s1, %s229
        %p231 = pneg %p80
        %p232 = pneg %p77
        %p233 = scmp.lt.s32.totalorder %s23, 7
        %s234 = scalar_select %p233, %s23, 7
        %s235 = smul.addr %s234, 2
        %s236 = smul.addr %s235, 8
        %s237 = scalar_lea.vmem %s2, %s236
        %p238 = pneg %p106
        %p239 = pneg %p103
        %p240 = pneg %p134
        %p241 = pneg %p131
        %s242 = sand.u32 %s121, 1
        %s243 = scalar_lea.sflag [#allocation3], %s242
        %s244 = sand.u32 %s121, 1
        %s245 = smul.addr %s244, 16
        %s246 = scalar_lea.vmem [#allocation2], %s245
        %p247 = pneg %p162
        %p248 = pneg %p159
        %s249 = smul.u32 2, %s24
        %p250 = scmp.lt.s32.totalorder %s23, 7
        %s251 = scalar_select %p250, %s23, 7
        %p252 = scmp.lt.s32.totalorder %s249, 1
        %s253 = scalar_select %p252, %s249, 1
        %s254 = smul.addr %s251, 2
        %s255 = sadd.s32 %s253, %s254
        %s256 = smul.addr %s255, 8
        %s257 = scalar_lea.vmem %s4, %s256
        %s258 = smul.u32 2, %s24
        %p259 = scmp.lt.s32.totalorder %s23, 7
        %s260 = scalar_select %p259, %s23, 7
        %p261 = scmp.lt.s32.totalorder %s258, 1
        %s262 = scalar_select %p261, %s258, 1
        %s263 = smul.addr %s260, 2
        %s264 = sadd.s32 %s262, %s263
        %s265 = smul.addr %s264, 8
        %s266 = scalar_lea.vmem %s0, %s265
        %s267 = smul.u32 2, %s24
        %p268 = scmp.lt.s32.totalorder %s23, 7
        %s269 = scalar_select %p268, %s23, 7
        %s270 = smul.addr %s269, 8
        %s271 = scalar_lea.vmem %s1, %s270
        %p272 = scmp.lt.s32.totalorder %s23, 7
        %s273 = scalar_select %p272, %s23, 7
        %s274 = smul.addr %s273, 2
        %s275 = smul.addr %s274, 8
        %s276 = scalar_lea.vmem %s2, %s275
        %s277 = smul.u32 2, %s24
        %s278 = smul.u32 2, %s24
        %p279 = scmp.lt.s32.totalorder %s23, 7
        %s280 = scalar_select %p279, %s23, 7
        %p281 = scmp.lt.s32.totalorder %s278, 1
        %s282 = scalar_select %p281, %s278, 1
        %s283 = smul.addr %s280, 2
        %s284 = sadd.s32 %s282, %s283
        %s285 = smul.addr %s284, 8
        %s286 = scalar_lea.vmem %s4, %s285
        %s287 = smul.u32 2, %s24
        %v288 = vld [vmem:[%s266] sm:$0xff]
        %v289 = vld [vmem:[%s266 + $0x8] sm:$0xff]
        %v290 = vmul.f32 %v288, 0.35355338
        %v291 = vmul.f32 %v289, 0.35355338
        %v292 = vld [vmem:[%s271] sm:$0xff]
        %v293 = vld [vmem:[%s276] sm:$0xff]
        %v294 = vld [vmem:[%s276 + $0x8] sm:$0xff]
        %vm295 = vcmask 64512
        %v297 = vsel %vm295, %v290, 0
        %v300 = vsel %vm295, %v291, 0
        %302 = vmatprep.subr.mxu0 0.0
        %303 = vmatpush1.msra.mxu0 %v292
        %304 = vmatprep.subr.mxu0 0.0
        %305 = vmatpush1.msra.mxu0 0.0
        %306 = vmatprep.subr.mxu0 0.0
        %307 = vmatpush1.msra.mxu0 0.0
        %308 = vmatprep.subr.mxu0 0.0
        %309 = vmatpush1.msra.mxu0 0.0
        %310 = vmatprep.subr.mxu0 0.0
        %311 = vmatpush1.msra.mxu0 0.0
        %312 = vmatprep.subr.mxu0 0.0
        %313 = vmatpush1.msra.mxu0 0.0
        %314 = vmatprep.subr.mxu0 0.0
        %315 = vmatpush1.msra.mxu0 0.0
        %316 = vmatprep.subr.mxu0 0.0
        %317 = vmatpush1.msra.mxu0 0.0
        %318 = vmatprep.subr.mxu0 0.0
        %319 = vmatpush1.msra.mxu0 0.0
        %320 = vmatprep.subr.mxu0 0.0
        %321 = vmatpush1.msra.mxu0 0.0
        %322 = vmatprep.subr.mxu0 0.0
        %323 = vmatpush1.msra.mxu0 0.0
        %324 = vmatprep.subr.mxu0 0.0
        %325 = vmatpush1.msra.mxu0 0.0
        %326 = vmatprep.subr.mxu0 0.0
        %327 = vmatpush1.msra.mxu0 0.0
        %328 = vmatprep.subr.mxu0 0.0
        %329 = vmatpush1.msra.mxu0 0.0
        %330 = vmatprep.subr.mxu0 0.0
        %331 = vmatpush1.msra.mxu0 0.0
        %332 = vmatprep.subr.mxu0 0.0
        %333 = vmatpush1.msra.mxu0 0.0
        %334 = vmatprep.subr.mxu0 0.0
        %335 = vmatpush1.msra.mxu0 0.0
        %336 = vmatprep.subr.mxu0 0.0
        %337 = vmatpush1.msra.mxu0 0.0
        %338 = vmatprep.subr.mxu0 0.0
        %339 = vmatpush1.msra.mxu0 0.0
        %340 = vmatprep.subr.mxu0 0.0
        %341 = vmatpush1.msra.mxu0 0.0
        %342 = vmatprep.subr.mxu0 0.0
        %343 = vmatpush1.msra.mxu0 0.0
        %344 = vmatprep.subr.mxu0 0.0
        %345 = vmatpush1.msra.mxu0 0.0
        %346 = vmatprep.subr.mxu0 0.0
        %347 = vmatpush1.msra.mxu0 0.0
        %348 = vmatprep.subr.mxu0 0.0
        %349 = vmatpush1.msra.mxu0 0.0
        %350 = vmatprep.subr.mxu0 0.0
        %351 = vmatpush1.msra.mxu0 0.0
        %352 = vmatprep.subr.mxu0 0.0
        %353 = vmatpush1.msra.mxu0 0.0
        %354 = vmatprep.subr.mxu0 0.0
        %355 = vmatpush1.msra.mxu0 0.0
        %356 = vmatprep.subr.mxu0 0.0
        %357 = vmatpush1.msra.mxu0 0.0
        %358 = vmatprep.subr.mxu0 0.0
        %359 = vmatpush1.msra.mxu0 0.0
        %360 = vmatprep.subr.mxu0 0.0
        %361 = vmatpush1.msra.mxu0 0.0
        %362 = vmatprep.subr.mxu0 0.0
        %363 = vmatpush1.msra.mxu0 0.0
        %364 = vmatprep.subr.mxu0 0.0
        %365 = vmatpush1.msra.mxu0 0.0
        %366 = vmatprep.mubr.f32.mxu0 0.0
        %367 = vmatmul.mubr.f32.gmra.mrb[0].mxu0 %v297
        %v368 = vpop.f32.mrb[0].mxu0
        %v369 = vadd.f32 0.0, %v368
        %v370 = vpop.f32.mrb[0].mxu0
        %371 = vmatprep.mubr.f32.mxu0 0.0
        %372 = vmatmul.mubr.f32.gmra.mrb[0].mxu0 %v300
        %v373 = vpop.f32.mrb[0].mxu0
        %v374 = vadd.f32 0.0, %v373
        %v375 = vpop.f32.mrb[0].mxu0
        %376 = vdwg.mxu0
        %vm377 = vcmask 130048
        %v378 = vsel %vm377, %v369, -inf
        %379 = vmax.xlane.f32.xlu0 %v378
        %v380 = vpop.xlane.xlu0 %379
        %v381 = vsel %vm377, %v374, -inf
        %382 = vmax.xlane.f32.xlu0 %v381
        %v383 = vpop.xlane.xlu0 %382
        %v384 = vsub.f32 %v369, %v380
        %v385 = vsub.f32 %v374, %v383
        %v386 = vmul.f32 %v384, 1.442695
        %v387 = vpow.pop %v386
        %v388 = vmul.f32 %v385, 1.442695
        %v389 = vpow.pop %v388
        %v390 = vsel %vm377, %v387, 0.0
        %391 = vadd.xlane.f32.xlu0 %v390
        %v392 = vpop.xlane.xlu0 %391
        %v393 = vsel %vm377, %v389, 0.0
        %394 = vadd.xlane.f32.xlu0 %v393
        %v395 = vpop.xlane.xlu0 %394
        %v396 = vrcp.pop %v392
        %v397 = vrcp.pop %v395
        %v398 = vmul.f32 %v387, %v396
        %v399 = vmul.f32 %v389, %v397
        %400 = vst.msk [vmem:[%s246] sm:$0xff] %vm377, %v398
        %401 = vst.msk [vmem:[%s246 + $0x8] sm:$0xff] %vm377, %v399
        %v403 = vsel %vm377, %v398, 0
        %v406 = vsel %vm377, %v399, 0
        %408 = vmatprep.subr.mxu0 0.0
        %409 = vmatpush1.msra.mxu0 %v293
        %410 = vmatprep.subr.mxu0 0.0
        %411 = vmatpush1.msra.mxu0 %v294
        %412 = vmatprep.subr.mxu0 0.0
        %413 = vmatpush1.msra.mxu0 0.0
        %414 = vmatprep.subr.mxu0 0.0
        %415 = vmatpush1.msra.mxu0 0.0
        %416 = vmatprep.subr.mxu0 0.0
        %417 = vmatpush1.msra.mxu0 0.0
        %418 = vmatprep.subr.mxu0 0.0
        %419 = vmatpush1.msra.mxu0 0.0
        %420 = vmatprep.subr.mxu0 0.0
        %421 = vmatpush1.msra.mxu0 0.0
        %422 = vmatprep.subr.mxu0 0.0
        %423 = vmatpush1.msra.mxu0 0.0
        %424 = vmatprep.subr.mxu0 0.0
        %425 = vmatpush1.msra.mxu0 0.0
        %426 = vmatprep.subr.mxu0 0.0
        %427 = vmatpush1.msra.mxu0 0.0
        %428 = vmatprep.subr.mxu0 0.0
        %429 = vmatpush1.msra.mxu0 0.0
        %430 = vmatprep.subr.mxu0 0.0
        %431 = vmatpush1.msra.mxu0 0.0
        %432 = vmatprep.subr.mxu0 0.0
        %433 = vmatpush1.msra.mxu0 0.0
        %434 = vmatprep.subr.mxu0 0.0
        %435 = vmatpush1.msra.mxu0 0.0
        %436 = vmatprep.subr.mxu0 0.0
        %437 = vmatpush1.msra.mxu0 0.0
        %438 = vmatprep.subr.mxu0 0.0
        %439 = vmatpush1.msra.mxu0 0.0
        %440 = vmatprep.subr.mxu0 0.0
        %441 = vmatpush1.msra.mxu0 0.0
        %442 = vmatprep.subr.mxu0 0.0
        %443 = vmatpush1.msra.mxu0 0.0
        %444 = vmatprep.subr.mxu0 0.0
        %445 = vmatpush1.msra.mxu0 0.0
        %446 = vmatprep.subr.mxu0 0.0
        %447 = vmatpush1.msra.mxu0 0.0
        %448 = vmatprep.subr.mxu0 0.0
        %449 = vmatpush1.msra.mxu0 0.0
        %450 = vmatprep.subr.mxu0 0.0
        %451 = vmatpush1.msra.mxu0 0.0
        %452 = vmatprep.subr.mxu0 0.0
        %453 = vmatpush1.msra.mxu0 0.0
        %454 = vmatprep.subr.mxu0 0.0
        %455 = vmatpush1.msra.mxu0 0.0
        %456 = vmatprep.subr.mxu0 0.0
        %457 = vmatpush1.msra.mxu0 0.0
        %458 = vmatprep.subr.mxu0 0.0
        %459 = vmatpush1.msra.mxu0 0.0
        %460 = vmatprep.subr.mxu0 0.0
        %461 = vmatpush1.msra.mxu0 0.0
        %462 = vmatprep.subr.mxu0 0.0
        %463 = vmatpush1.msra.mxu0 0.0
        %464 = vmatprep.subr.mxu0 0.0
        %465 = vmatpush1.msra.mxu0 0.0
        %466 = vmatprep.subr.mxu0 0.0
        %467 = vmatpush1.msra.mxu0 0.0
        %468 = vmatprep.subr.mxu0 0.0
        %469 = vmatpush1.msra.mxu0 0.0
        %470 = vmatprep.subr.mxu0 0.0
        %471 = vmatpush1.msra.mxu0 0.0
        %472 = vmatprep.mubr.f32.mxu0 0.0
        %473 = vmatmul.mubr.f32.gmra.mrb[0].mxu0 %v403
        %v474 = vpop.f32.mrb[0].mxu0
        %v475 = vadd.f32 0.0, %v474
        %v476 = vpop.f32.mrb[0].mxu0
        %477 = vmatprep.mubr.f32.mxu0 0.0
        %478 = vmatmul.mubr.f32.gmra.mrb[0].mxu0 %v406
        %v479 = vpop.f32.mrb[0].mxu0
        %v480 = vadd.f32 0.0, %v479
        %v481 = vpop.f32.mrb[0].mxu0
        %482 = vdwg.mxu0
        %483 = vst.msk [vmem:[%s286] sm:$0xff] %vm295, %v475
        %484 = vst.msk [vmem:[%s286 + $0x8] sm:$0xff] %vm295, %v480
        %s485 = sand.u32 %s121, 1
        %s486 = scalar_lea.sflag [#allocation3], %s485
        %s487 = sand.u32 %s121, 1
        %s488 = smul.addr %s487, 16
        %s489 = scalar_lea.vmem [#allocation2], %s488
        %s490 = smul.u32 2, %s24
        %p491 = scmp.lt.s32.totalorder %s23, 7
        %s492 = scalar_select %p491, %s23, 7
        %p493 = scmp.lt.s32.totalorder %s490, 1
        %s494 = scalar_select %p493, %s490, 1
        %s495 = smul.addr %s492, 2
        %s496 = sadd.s32 %s494, %s495
        %s497 = smul.addr %s496, 8
        %s498 = scalar_lea.vmem %s4, %s497
        // Predicated region
        $region33: #{tpu_custom_call.1} parent=31 // pred_check
          %p499 = pneg %p131
        $region34: #{tpu_custom_call.1} parent=31 // pred_check_branch
          %501 = sbr.rel (%p499) target = $region36
        $region35: #{tpu_custom_call.1} parent=31 // pred_region
          %s502 = smul.u32 2, %s24
          %s504 = ssub.s32 256, 256
          %505 = vsyncadd %s486, %s504
          %s506 = smul.addr %s23, 2
          %s507 = sadd.s32 %s502, %s506
          %s508 = smul.addr %s507, 128
          %s509 = scalar_lea.hbm %s3, %s508
          %s510 = sshll.u32 %s489, 4
          %s511 = int_to_ptr.vmem [resolvable:$true] %s510
          %516 = dma.vmem_to_hbm [thread:$0]  %s511, 256, %s509, %s486, 128, 128, 8
        $region36: #{tpu_custom_call.1} parent=31 // pred_fallthru
          _
        // Predicated region
        $region37: #{tpu_custom_call.1} parent=31 // pred_check
          %p517 = pneg %p159
        $region38: #{tpu_custom_call.1} parent=31 // pred_check_branch
          %519 = sbr.rel (%p517) target = $region40
        $region39: #{tpu_custom_call.1} parent=31 // pred_region
          %s520 = smul.u32 2, %s24
        $region40: #{tpu_custom_call.1} parent=31 // pred_fallthru
          _
      $region32: #{tpu_custom_call.1} parent=5 // pred_fallthru
        _
      %p521 = scmp.le.s32.totalorder 2, %s14
      // Predicated region
      $region41: #{tpu_custom_call.1} parent=5 // pred_check
        %p522 = pneg %p521
      $region42: #{tpu_custom_call.1} parent=5 // pred_check_branch
        %524 = sbr.rel (%p522) target = $region44
      $region43: #{tpu_custom_call.1} parent=5 // pred_region
        %s525 = ssub.s32 %s14, 2
        // Predicated region
        $region45: #{tpu_custom_call.1} parent=43 // pred_check
          %p526 = pneg %p137
        $region46: #{tpu_custom_call.1} parent=43 // pred_check_branch
          %528 = sbr.rel (%p526) target = $region48
        $region47: #{tpu_custom_call.1} parent=43 // pred_region
          %s529 = sand.u32 %s122, 1
          %s530 = scalar_lea.sflag [#allocation3], %s529
          %s531 = sand.u32 %s122, 1
          %s532 = smul.addr %s531, 16
          %s533 = scalar_lea.vmem [#allocation2], %s532
          %534 = dma.done %s530, 256
        $region48: #{tpu_custom_call.1} parent=43 // pred_fallthru
          _
        // Predicated region
        $region49: #{tpu_custom_call.1} parent=43 // pred_check
          %p535 = pneg %p165
        $region50: #{tpu_custom_call.1} parent=43 // pred_check_branch
          %537 = sbr.rel (%p535) target = $region52
        $region51: #{tpu_custom_call.1} parent=43 // pred_region
          %s538 = smul.u32 2, %s26
          %p539 = scmp.lt.s32.totalorder %s25, 7
          %s540 = scalar_select %p539, %s25, 7
          %p541 = scmp.lt.s32.totalorder %s538, 1
          %s542 = scalar_select %p541, %s538, 1
          %s543 = smul.addr %s540, 2
          %s544 = sadd.s32 %s542, %s543
          %s545 = smul.addr %s544, 8
          %s546 = scalar_lea.vmem %s4, %s545
        $region52: #{tpu_custom_call.1} parent=43 // pred_fallthru
          _
      $region44: #{tpu_custom_call.1} parent=5 // pred_fallthru
        _
    $region6: #{tpu_custom_call.1} parent=1 // loop_footer
      %s18 = sadd.s32 1, %s14
    $region7: #{tpu_custom_call.1} parent=1 // loop_footer_branch
      %13 = sbr.rel target = $region3
    $region8: #{tpu_custom_call.1} parent=1 // loop_exit
      _
    %547 = vsyncpa [#allocation3], 1
    %s548 = scalar_lea.sflag [#allocation3], 1
    %549 = vsyncpa %s548, 1

</llo_original>
